<compile_context>
chip_gen: v6e
topology: v6e:2x2x1
jax: 0.10.0
libtpu: 0.0.40
codegen_flags: <defaults>
</compile_context>

<pallas_src>
import functools

import jax
import jax.numpy as jnp
from jax.experimental import pallas as pl
from jax.experimental.pallas import tpu as pltpu


def _bias_bic_kernel(ab_ref, x_ref, out_ref, *, low, high, tile_c, col_blk0):
    # ab_ref:  SMEM f32[2] -> (alpha, beta) (always f32, independent of x dtype)
    # x_ref / out_ref: VMEM (TB, TC) tiles; out aliases x's HBM buffer.
    alpha = ab_ref[0]
    beta = ab_ref[1]

    # Absolute first column of this tile (col_blk0 / tile_c are static ints).
    col0 = (pl.program_id(1) + col_blk0) * tile_c
    fully_inside = jnp.logical_and(col0 >= low, col0 + tile_c <= high)

    @pl.when(fully_inside)
    def _():
        # Interior band tile: plain scale-shift, no mask work.
        xf = x_ref[...].astype(jnp.float32)
        out_ref[...] = (xf * alpha + beta).astype(out_ref.dtype)

    @pl.when(jnp.logical_not(fully_inside))
    def _():
        # Boundary tile: blend against the raw input tile so columns outside
        # [low, high) are written back bit-exactly.
        col = jax.lax.broadcasted_iota(jnp.int32, (1, tile_c), 1) + col0
        mask = jnp.logical_and(col >= low, col < high)
        xf = x_ref[...].astype(jnp.float32)
        y = (xf * alpha + beta).astype(out_ref.dtype)
        out_ref[...] = jnp.where(mask, y, x_ref[...])


def _row_align(dtype):
    # Native sublane packing: 8 rows for 32-bit, 16 for 16-bit, 32 for 8-bit.
    return max(8, 32 // jnp.dtype(dtype).itemsize)


def _pick_row_tile(b, pref, align):
    if b > pref:
        return max((pref // align) * align, align)
    # Prefer >= 2 row blocks (v7x megacore) when it splits cleanly.
    if b >= 2 * align and b % (2 * align) == 0:
        return b // 2
    return b                      # block == full dim: always legal


def _pick_col_tile(c, pref):
    if c <= pref:
        return c                  # block == full dim: always legal
    return max((pref // 128) * 128, 128)


def bias_layer_bic(x, alpha, beta, low_range, high_range, *,
                   tile_b=1024, tile_c=1024):
    """x: (B, C). alpha/beta: scalars. low/high: static Python ints."""
    B, C = x.shape
    low = max(0, min(int(low_range), C))
    high = max(low, min(int(high_range), C))
    if high <= low:
        return x                  # empty band: identity under JAX value semantics

    tb = _pick_row_tile(B, tile_b, _row_align(x.dtype))
    tc = _pick_col_tile(C, tile_c)

    # Column-block window covering [low, high).
    col_blk0 = low // tc
    col_blk1 = pl.cdiv(high, tc)
    n_col_blocks = col_blk1 - col_blk0

    # Keep parameters in f32 (PyTorch param math), cast only the result.
    ab = jnp.asarray([alpha, beta], dtype=jnp.float32)

    grid = (pl.cdiv(B, tb), n_col_blocks)
    kernel = functools.partial(_bias_bic_kernel, low=low, high=high,
                               tile_c=tc, col_blk0=col_blk0)

    band_cols = min(n_col_blocks * tc, C)
    block = pl.BlockSpec((tb, tc), lambda i, j: (i, j + col_blk0))

    return pl.pallas_call(
        kernel,
        out_shape=jax.ShapeDtypeStruct((B, C), x.dtype),
        grid=grid,
        in_specs=[
            pl.BlockSpec(memory_space=pltpu.SMEM),   # (alpha, beta) f32
            block,                                   # x band tiles only
        ],
        out_specs=block,
        # Output HBM buffer aliases x's buffer: untouched columns keep x's data.
        input_output_aliases={1: 0},
        cost_estimate=pl.CostEstimate(
            flops=2 * B * (high - low),
            transcendentals=0,
            bytes_accessed=2 * B * band_cols * x.dtype.itemsize),
        compiler_params=pltpu.CompilerParams(
            dimension_semantics=("parallel", "parallel"),
            vmem_limit_bytes=32 * 1024 * 1024),      # tiles <= ~16 MiB live
    )(ab, x)


def _ref(x, a, b, lo, hi):
    if hi <= lo:
        return x
    return x.at[:, lo:hi].set((a * x[:, lo:hi] + b).astype(x.dtype))


if __name__ == "__main__":
    key = jax.random.PRNGKey(0)
    k1, k2, k3, k4 = jax.random.split(key, 4)

    # Deterministic non-trivial params (module init is alpha=1, beta=0).
    alpha = jnp.float32(1.5)
    beta = jnp.float32(0.25)

    # --- Test 1: module-sized example (batch=2, num_classes=16), single block ---
    B, C = 2, 16
    low, high = 4, 12
    x = jax.random.normal(k1, (B, C), dtype=jnp.float32)
    ref = jax.block_until_ready(_ref(x, alpha, beta, low, high))
    out = jax.block_until_ready(bias_layer_bic(x, alpha, beta, low, high))
    assert jnp.allclose(out, ref, atol=1e-6), "mismatch (small f32)"
    # x.clone() semantics: the caller's x must be untouched by the aliased call.
    assert jnp.allclose(alpha * x[:, low:high] + beta, ref[:, low:high],
                        atol=1e-6), "input x was clobbered"

    # --- Test 2: band-restricted grid; untouched column tiles on both sides ---
    B2, C2 = 16, 384
    low2, high2 = 130, 250          # only the [128,256) column tile is visited
    x2 = jax.random.normal(k2, (B2, C2), dtype=jnp.float32)
    ref2 = jax.block_until_ready(_ref(x2, alpha, beta, low2, high2))
    out2 = jax.block_until_ready(
        bias_layer_bic(x2, alpha, beta, low2, high2, tile_b=8, tile_c=128))
    assert jnp.allclose(out2, ref2, atol=1e-6), "mismatch (band-restricted f32)"

    # --- Test 3: interior fast path, multiple row + column blocks ---
    B3, C3 = 32, 1024
    low3, high3 = 256, 768
    x3 = jax.random.normal(k3, (B3, C3), dtype=jnp.float32)
    ref3 = jax.block_until_ready(_ref(x3, alpha, beta, low3, high3))
    out3 = jax.block_until_ready(
        bias_layer_bic(x3, alpha, beta, low3, high3, tile_b=8, tile_c=256))
    assert jnp.allclose(out3, ref3, atol=1e-6), "mismatch (interior fast path)"

    # --- Test 4: bf16 with dtype-aware sublane alignment and 2 row blocks ---
    B4, C4 = 32, 256
    low4, high4 = 100, 200
    x4 = jax.random.normal(k4, (B4, C4), dtype=jnp.float32).astype(jnp.bfloat16)
    ref4 = jax.block_until_ready(_ref(x4, alpha, beta, low4, high4))
    out4 = jax.block_until_ready(bias_layer_bic(x4, alpha, beta, low4, high4))
    assert jnp.allclose(out4.astype(jnp.float32), ref4.astype(jnp.float32),
                        atol=2e-2), "mismatch (bf16)"

    # --- Test 5: empty range is an identity ---
    out5 = jax.block_until_ready(bias_layer_bic(x, alpha, beta, 5, 5))
    assert jnp.allclose(out5, x), "mismatch (empty range)"

    print("KERNEL_OK")
</pallas_src>

<mosaic_0001>
module attributes {stable_mosaic.version = 11 : i64} {
  func.func @_bias_bic_kernel(%arg0: i32, %arg1: i32, %arg2: memref<2xf32, #tpu.memory_space<smem>>, %arg3: memref<2x16xf32, #tpu.memory_space<vmem>>, %arg4: memref<2x16xf32, #tpu.memory_space<vmem>>) attributes {dimension_semantics = [#tpu.dimension_semantics<parallel>, #tpu.dimension_semantics<parallel>], iteration_bounds = array<i64: 1, 1>, scalar_prefetch = 0 : i64, scratch_operands = 0 : i64, tpu.core_type = #tpu.core_type<tc>, window_params = [{transform_indices = @transform_0, window_bounds = array<i64: 2>}, {transform_indices = @transform_1, window_bounds = array<i64: 2, 16>}, {transform_indices = @transform_2, window_bounds = array<i64: 2, 16>}]} {
    %c0 = arith.constant 0 : index
    %0 = memref.load %arg2[%c0] : memref<2xf32, #tpu.memory_space<smem>>
    %c1 = arith.constant 1 : index
    %1 = memref.load %arg2[%c1] : memref<2xf32, #tpu.memory_space<smem>>
    %c0_i32 = arith.constant 0 : i32
    %2 = arith.addi %arg1, %c0_i32 : i32
    %c16_i32 = arith.constant 16 : i32
    %3 = arith.muli %2, %c16_i32 : i32
    %c4_i32 = arith.constant 4 : i32
    %4 = arith.cmpi sge, %3, %c4_i32 : i32
    %c16_i32_0 = arith.constant 16 : i32
    %5 = arith.addi %3, %c16_i32_0 : i32
    %c12_i32 = arith.constant 12 : i32
    %6 = arith.cmpi sle, %5, %c12_i32 : i32
    %7 = arith.andi %4, %6 : i1
    %8 = arith.extui %7 : i1 to i32
    %c0_i32_1 = arith.constant 0 : i32
    %9 = arith.cmpi ne, %8, %c0_i32_1 : i32
    scf.if %9 {
      %c0_3 = arith.constant 0 : index
      %c0_4 = arith.constant 0 : index
      %13 = vector.load %arg3[%c0_3, %c0_4] : memref<2x16xf32, #tpu.memory_space<vmem>>, vector<2x16xf32>
      %14 = vector.broadcast %0 : f32 to vector<2x16xf32>
      %15 = arith.mulf %13, %14 : vector<2x16xf32>
      %16 = vector.broadcast %1 : f32 to vector<2x16xf32>
      %17 = arith.addf %15, %16 : vector<2x16xf32>
      %c0_5 = arith.constant 0 : index
      %c0_6 = arith.constant 0 : index
      %18 = vector.load %arg4[%c0_5, %c0_6] : memref<2x16xf32, #tpu.memory_space<vmem>>, vector<2x16xf32>
      tpu.vector_store %arg4[%c0_5, %c0_6], %17 {strides = array<i32>} : memref<2x16xf32, #tpu.memory_space<vmem>>, vector<2x16xf32>,
    } else {
    }
    %true = arith.constant true
    %10 = arith.xori %7, %true : i1
    %11 = arith.extui %10 : i1 to i32
    %c0_i32_2 = arith.constant 0 : i32
    %12 = arith.cmpi ne, %11, %c0_i32_2 : i32
    scf.if %12 {
      %13 = tpu.iota {dimensions = array<i32: 1>} : vector<1x16xi32>
      %14 = vector.broadcast %3 : i32 to vector<1x16xi32>
      %15 = arith.addi %13, %14 : vector<1x16xi32>
      %c4_i32_3 = arith.constant 4 : i32
      %16 = vector.broadcast %c4_i32_3 : i32 to vector<1x16xi32>
      %17 = arith.cmpi sge, %15, %16 : vector<1x16xi32>
      %c12_i32_4 = arith.constant 12 : i32
      %18 = vector.broadcast %c12_i32_4 : i32 to vector<1x16xi32>
      %19 = arith.cmpi slt, %15, %18 : vector<1x16xi32>
      %20 = arith.andi %17, %19 : vector<1x16xi1>
      %c0_5 = arith.constant 0 : index
      %c0_6 = arith.constant 0 : index
      %21 = vector.load %arg3[%c0_5, %c0_6] : memref<2x16xf32, #tpu.memory_space<vmem>>, vector<2x16xf32>
      %22 = vector.broadcast %0 : f32 to vector<2x16xf32>
      %23 = arith.mulf %21, %22 : vector<2x16xf32>
      %24 = vector.broadcast %1 : f32 to vector<2x16xf32>
      %25 = arith.addf %23, %24 : vector<2x16xf32>
      %c0_7 = arith.constant 0 : index
      %c0_8 = arith.constant 0 : index
      %26 = vector.load %arg3[%c0_7, %c0_8] : memref<2x16xf32, #tpu.memory_space<vmem>>, vector<2x16xf32>
      %27 = vector.shape_cast %20 : vector<1x16xi1> to vector<1x16xi1>
      %28 = vector.broadcast %27 : vector<1x16xi1> to vector<2x16xi1>
      %29 = arith.select %28, %25, %26 : vector<2x16xi1>, vector<2x16xf32>
      %c0_9 = arith.constant 0 : index
      %c0_10 = arith.constant 0 : index
      %30 = vector.load %arg4[%c0_9, %c0_10] : memref<2x16xf32, #tpu.memory_space<vmem>>, vector<2x16xf32>
      tpu.vector_store %arg4[%c0_9, %c0_10], %29 {strides = array<i32>} : memref<2x16xf32, #tpu.memory_space<vmem>>, vector<2x16xf32>,
    } else {
    }
    return
  }
  func.func @transform_0(%arg0: i32, %arg1: i32) -> i32 {
    %c0_i32 = arith.constant 0 : i32
    %c0_i32_0 = arith.constant 0 : i32
    return %c0_i32 : i32
  }
  func.func @transform_1(%arg0: i32, %arg1: i32) -> (i32, i32) {
    %c0_i32 = arith.constant 0 : i32
    %0 = arith.addi %arg1, %c0_i32 : i32
    %c0_i32_0 = arith.constant 0 : i32
    return %arg0, %0 : i32, i32
  }
  func.func @transform_2(%arg0: i32, %arg1: i32) -> (i32, i32) {
    %c0_i32 = arith.constant 0 : i32
    %0 = arith.addi %arg1, %c0_i32 : i32
    %c0_i32_0 = arith.constant 0 : i32
    return %arg0, %0 : i32, i32
  }
}

</mosaic_0001>

<llo_original>
// kernel: tpu_custom_call.1
$region0: #{tpu_custom_call.1}
  #allocation0 [shape = 'u32[]', space=smem, size = 0x4, offset = 0x4, fixed_abs, tag = 'smem constant byte address 0x4 - core index']
  #allocation1 [shape = 'u32[144,128]{1,0:T(1,128)}', space=vmem, size = 0x12000, scoped, tag = 'internal scratch']
  %s0 = inlined_call_operand.vmem [shape: f32[2], index: 0, kind: input, shape index: {}]
  %s1 = inlined_call_operand.hbm [shape: f32[2,16], index: 1, kind: input, shape index: {}, may-alias: {1,2}]
  %s2 = inlined_call_operand.hbm [shape: f32[2,16], index: 2, kind: output, shape index: {}, may-alias: {1,2}]
  %s3 = sld [smem:[#allocation0]]
  $region34: #{tpu_custom_call.1} parent=0
    _
  %s5 = ssub.s32 1, %s3
  %s6 = scalar_select 0, %s5, %s3
  $region1: #{tpu_custom_call.1} parent=0
    #allocation2 [shape = 'u8[512]{0}', space=smem, size = 0x200, scoped, tag = 'input window, operand 0, single buffered']
    #allocation3 [shape = 's32[1]{0}', space=sflag, size = 0x4, scoped, tag = 'scoped memory for tpu_custom_call.1']
    #allocation4 [shape = 's32[1]{0}', space=sflag, size = 0x4, scoped, tag = 'scoped memory for tpu_custom_call.1']
    #allocation5 [shape = 's32[1]{0}', space=sflag, size = 0x4, scoped, tag = 'scoped memory for tpu_custom_call.1']
    #allocation6 [shape = 'u8[1024]{0}', space=vmem, size = 0x400, scoped, tag = 'input window, operand 1, single buffered']
    #allocation7 [shape = 'u8[1024]{0}', space=vmem, size = 0x400, scoped, tag = 'output window, operand 0, single buffered']
    %7 = vsyncpa [#allocation5], 0
    %8 = vsyncpa [#allocation3], 0
    %9 = vsyncpa [#allocation4], 0
    // Predicated region
    $region2: #{tpu_custom_call.1} parent=1 // pred_check
      _
    $region3: #{tpu_custom_call.1} parent=1 // pred_check_branch
      %11 = sbr.rel (0) target = $region5
    $region4: #{tpu_custom_call.1} parent=1 // pred_region
      %s13 = ssub.s32 16, 16
      %14 = vsyncadd [#allocation5], %s13
      %s16 = sshll.u32 %s0, 4
      %s17 = int_to_ptr.vmem [resolvable:$true] %s16
      %19 = dma.vmem_to_smem %s17, 16, [#allocation2], [#allocation5]
    $region5: #{tpu_custom_call.1} parent=1 // pred_fallthru
      _
    // Predicated region
    $region6: #{tpu_custom_call.1} parent=1 // pred_check
      _
    $region7: #{tpu_custom_call.1} parent=1 // pred_check_branch
      %21 = sbr.rel (0) target = $region9
    $region8: #{tpu_custom_call.1} parent=1 // pred_region
      %s23 = ssub.s32 32, 32
      %24 = vsyncadd [#allocation3], %s23
      %s26 = sshll.u32 [#allocation6], 4
      %s27 = int_to_ptr.vmem [resolvable:$true] %s26
      %29 = dma.hbm_to_vmem [thread:$0]  %s1, 32, %s27, [#allocation3]
    $region9: #{tpu_custom_call.1} parent=1 // pred_fallthru
      _
    // Predicated region
    $region10: #{tpu_custom_call.1} parent=1 // pred_check
      _
    $region11: #{tpu_custom_call.1} parent=1 // pred_check_branch
      %31 = sbr.rel (0) target = $region13
    $region12: #{tpu_custom_call.1} parent=1 // pred_region
      %32 = dma.done [#allocation5], 16
    $region13: #{tpu_custom_call.1} parent=1 // pred_fallthru
      _
    // Predicated region
    $region14: #{tpu_custom_call.1} parent=1 // pred_check
      _
    $region15: #{tpu_custom_call.1} parent=1 // pred_check_branch
      %34 = sbr.rel (0) target = $region17
    $region16: #{tpu_custom_call.1} parent=1 // pred_region
      %35 = dma.done [#allocation3], 32
    $region17: #{tpu_custom_call.1} parent=1 // pred_fallthru
      _
    %36 = sfence
    %s37 = sld [smem:[#allocation2]]
    %s38 = sld [smem:[#allocation2 + $0x1]]
    %s39 = smul.u32 0, 16
    %p40 = scmp.ge.s32.totalorder %s39, 4
    %s41 = sadd.s32 %s39, 16
    %p42 = scmp.le.s32.totalorder %s41, 12
    %p43 = pnand %p40, %p42
    %p44 = pneg %p43
    // Predicated region
    $region18: #{tpu_custom_call.1} parent=1 // pred_check
      _
    $region19: #{tpu_custom_call.1} parent=1 // pred_check_branch
      %46 = sbr.rel (%p43) target = $region21
    $region20: #{tpu_custom_call.1} parent=1 // pred_region
      %v47 = vld [vmem:[#allocation6] sm:$0x3]
      %v48 = vstv %s37
      %v49 = vmul.f32 %v47, %v48
      %v50 = vstv %s38
      %v51 = vadd.f32 %v49, %v50
      %vm52 = vcmask 123904
      %53 = vst.msk [vmem:[#allocation7] sm:$0x3] %vm52, %v51
    $region21: #{tpu_custom_call.1} parent=1 // pred_fallthru
      _
    %p54 = pneg %p44
    // Predicated region
    $region22: #{tpu_custom_call.1} parent=1 // pred_check
      _
    $region23: #{tpu_custom_call.1} parent=1 // pred_check_branch
      %56 = sbr.rel (%p44) target = $region25
    $region24: #{tpu_custom_call.1} parent=1 // pred_region
      %v57 = vlaneseq
      %v58 = vand.u32 %v57, 127
      %v59 = vstv %s39
      %v60 = vadd.s32 %v58, %v59
      %vm61 = vcmp.ge.s32.totalorder %v60, 4
      %vm62 = vcmp.lt.s32.totalorder %v60, 12
      %vm63 = vmand %vm61, %vm62
      %v64 = vld [vmem:[#allocation6] sm:$0x3]
      %v65 = vstv %s37
      %v66 = vmul.f32 %v64, %v65
      %v67 = vstv %s38
      %v68 = vadd.f32 %v66, %v67
      %v69 = vsel %vm63, 1, 0
      %vm70 = vcmp.eq.s32.totalorder %v69, 1
      %v71 = vsel %vm70, %v68, %v64
      %vm72 = vcmask 123904
      %73 = vst.msk [vmem:[#allocation7] sm:$0x3] %vm72, %v71
    $region25: #{tpu_custom_call.1} parent=1 // pred_fallthru
      _
    // Predicated region
    $region26: #{tpu_custom_call.1} parent=1 // pred_check
      _
    $region27: #{tpu_custom_call.1} parent=1 // pred_check_branch
      %75 = sbr.rel (0) target = $region29
    $region28: #{tpu_custom_call.1} parent=1 // pred_region
      %s77 = ssub.s32 32, 32
      %78 = vsyncadd [#allocation4], %s77
      %s80 = sshll.u32 [#allocation7], 4
      %s81 = int_to_ptr.vmem [resolvable:$true] %s80
      %83 = dma.vmem_to_hbm [thread:$0]  %s81, 32, %s2, [#allocation4]
    $region29: #{tpu_custom_call.1} parent=1 // pred_fallthru
      _
    // Predicated region
    $region30: #{tpu_custom_call.1} parent=1 // pred_check
      _
    $region31: #{tpu_custom_call.1} parent=1 // pred_check_branch
      %85 = sbr.rel (0) target = $region33
    $region32: #{tpu_custom_call.1} parent=1 // pred_region
      %86 = dma.done [#allocation4], 32
    $region33: #{tpu_custom_call.1} parent=1 // pred_fallthru
      _
    %87 = vsyncpa [#allocation3], 1
    %88 = vsyncpa [#allocation4], 1
    %89 = vsyncpa [#allocation5], 1

</llo_original>
